<compile_context>
chip_gen: v7x
topology: tpu7x:2x2x1
jax: 0.10.0
libtpu: 0.0.40
codegen_flags: <defaults>
</compile_context>

<pallas_src>
import functools

import jax
import jax.numpy as jnp
from jax.experimental import pallas as pl
from jax.experimental.pallas import tpu as pltpu


def mlp_kernel(x_ref, w1_ref, b1_ref, w2_ref, b2_ref, w3_ref, b3_ref,
               w4_ref, b4_ref, out_ref):
    # Lane-dense: batch is the last dim of every tensor here.
    x = x_ref[...]                                          # (32, TB)
    h1 = jax.nn.relu(
        jnp.dot(w1_ref[...], x, preferred_element_type=jnp.float32)
        + b1_ref[...])                                      # (16, TB)
    h2 = jax.nn.sigmoid(
        jnp.dot(w2_ref[...], h1, preferred_element_type=jnp.float32)
        + b2_ref[...])                                      # (8, TB)
    h3 = jnp.tanh(
        jnp.dot(w3_ref[...], h2, preferred_element_type=jnp.float32)
        + b3_ref[...])                                      # (4, TB)
    out_ref[...] = (
        jnp.dot(w4_ref[...], h3, preferred_element_type=jnp.float32)
        + b4_ref[...])                                      # (2, TB)


def _round_up(n, m):
    return ((n + m - 1) // m) * m


@functools.partial(jax.jit, static_argnames=("block_b",))
def multi_layer_net(x, params, block_b=1024):
    """x: (B, 32) float32 (row-major, same as the torch module's input).

    params: w{i}: (out, in) float32 (torch nn.Linear layout), b{i}: (out, 1).
    Returns (B, 2) float32.
    """
    B = x.shape[0]
    w1, b1, w2, b2, w3, b3, w4, b4 = (
        params["w1"], params["b1"], params["w2"], params["b2"],
        params["w3"], params["b3"], params["w4"], params["b4"])

    # Batch tile: multiple of 128 (lane width), capped at block_b; pad B up.
    tb = min(block_b, _round_up(B, 128))
    b_pad = _round_up(B, tb)
    grid = (b_pad // tb,)

    # Lane-dense layout: batch in lanes.  Pad extra columns with zeros; they
    # compute harmless garbage and are sliced off below.
    xt = x.T.astype(jnp.float32)                            # (32, B)
    if b_pad != B:
        xt = jnp.pad(xt, ((0, 0), (0, b_pad - B)))

    resident = lambda a: pl.BlockSpec(a.shape, lambda i: (0, 0))

    weight_bytes = sum(int(a.size) * 4 for a in (w1, b1, w2, b2, w3, b3, w4, b4))
    cost = pl.CostEstimate(
        flops=2 * 680 * b_pad,                  # 2*(32*16 + 16*8 + 8*4 + 4*2)/col
        transcendentals=12 * b_pad,             # sigmoid(8) + tanh(4) per column
        bytes_accessed=b_pad * (32 + 2) * 4 + weight_bytes,
    )

    out_t = pl.pallas_call(
        mlp_kernel,
        out_shape=jax.ShapeDtypeStruct((2, b_pad), jnp.float32),
        grid=grid,
        in_specs=[
            pl.BlockSpec((32, tb), lambda i: (0, i)),       # x tile, pipelined
            resident(w1), resident(b1),
            resident(w2), resident(b2),
            resident(w3), resident(b3),
            resident(w4), resident(b4),
        ],
        out_specs=pl.BlockSpec((2, tb), lambda i: (0, i)),
        compiler_params=pltpu.CompilerParams(
            dimension_semantics=("parallel",),
            vmem_limit_bytes=32 * 1024 * 1024,
        ),
        cost_estimate=cost,
    )(xt, w1, b1, w2, b2, w3, b3, w4, b4)

    return out_t[:, :B].T


def init_params(key):
    """Deterministic init mimicking torch.nn.Linear default:
    U(-1/sqrt(fan_in), 1/sqrt(fan_in)). Weights stored (out, in), biases (out, 1)."""
    dims = [(32, 16), (16, 8), (8, 4), (4, 2)]
    params = {}
    for idx, (fin, fout) in enumerate(dims, start=1):
        key, kw, kb = jax.random.split(key, 3)
        bound = 1.0 / jnp.sqrt(float(fin))
        params[f"w{idx}"] = jax.random.uniform(
            kw, (fout, fin), jnp.float32, minval=-bound, maxval=bound)
        params[f"b{idx}"] = jax.random.uniform(
            kb, (fout, 1), jnp.float32, minval=-bound, maxval=bound)
    return params


def reference_forward(x, p):
    h1 = jax.nn.relu(x @ p["w1"].T + p["b1"][:, 0])
    h2 = jax.nn.sigmoid(h1 @ p["w2"].T + p["b2"][:, 0])
    h3 = jnp.tanh(h2 @ p["w3"].T + p["b3"][:, 0])
    return h3 @ p["w4"].T + p["b4"][:, 0]


if __name__ == "__main__":
    key = jax.random.PRNGKey(0)
    kx, kx2, kp = jax.random.split(key, 3)
    params = init_params(kp)

    # Small case (matches the module's typical tiny-batch usage).
    B = 8
    x = jax.random.normal(kx, (B, 32), dtype=jnp.float32)
    out = jax.block_until_ready(multi_layer_net(x, params))
    ref = reference_forward(x, params)
    assert out.shape == (B, 2), out.shape
    assert jnp.allclose(out, ref, atol=1e-5, rtol=1e-5), "mismatch (small batch)"

    # Larger, non-multiple-of-tile batch to exercise the grid + padding path.
    B2 = 600
    x2 = jax.random.normal(kx2, (B2, 32), dtype=jnp.float32)
    out2 = jax.block_until_ready(multi_layer_net(x2, params))
    ref2 = reference_forward(x2, params)
    assert out2.shape == (B2, 2), out2.shape
    assert jnp.allclose(out2, ref2, atol=1e-5, rtol=1e-5), "mismatch (tiled batch)"

    print("KERNEL_OK")
</pallas_src>

<mosaic_0001>
module attributes {stable_mosaic.version = 11 : i64} {
  func.func @mlp_kernel(%arg0: i32, %arg1: memref<32x128xf32, #tpu.memory_space<vmem>>, %arg2: memref<16x32xf32, #tpu.memory_space<vmem>>, %arg3: memref<16x1xf32, #tpu.memory_space<vmem>>, %arg4: memref<8x16xf32, #tpu.memory_space<vmem>>, %arg5: memref<8x1xf32, #tpu.memory_space<vmem>>, %arg6: memref<4x8xf32, #tpu.memory_space<vmem>>, %arg7: memref<4x1xf32, #tpu.memory_space<vmem>>, %arg8: memref<2x4xf32, #tpu.memory_space<vmem>>, %arg9: memref<2x1xf32, #tpu.memory_space<vmem>>, %arg10: memref<2x128xf32, #tpu.memory_space<vmem>>) attributes {dimension_semantics = [#tpu.dimension_semantics<parallel>], iteration_bounds = array<i64: 1>, scalar_prefetch = 0 : i64, scratch_operands = 0 : i64, tpu.core_type = #tpu.core_type<tc>, window_params = [{transform_indices = @transform_0, window_bounds = array<i64: 32, 128>}, {pipeline_mode = #tpu.pipeline_mode<synchronous>, transform_indices = @transform_1, window_bounds = array<i64: 16, 32>}, {pipeline_mode = #tpu.pipeline_mode<synchronous>, transform_indices = @transform_2, window_bounds = array<i64: 16, 1>}, {pipeline_mode = #tpu.pipeline_mode<synchronous>, transform_indices = @transform_3, window_bounds = array<i64: 8, 16>}, {pipeline_mode = #tpu.pipeline_mode<synchronous>, transform_indices = @transform_4, window_bounds = array<i64: 8, 1>}, {pipeline_mode = #tpu.pipeline_mode<synchronous>, transform_indices = @transform_5, window_bounds = array<i64: 4, 8>}, {pipeline_mode = #tpu.pipeline_mode<synchronous>, transform_indices = @transform_6, window_bounds = array<i64: 4, 1>}, {pipeline_mode = #tpu.pipeline_mode<synchronous>, transform_indices = @transform_7, window_bounds = array<i64: 2, 4>}, {pipeline_mode = #tpu.pipeline_mode<synchronous>, transform_indices = @transform_8, window_bounds = array<i64: 2, 1>}, {transform_indices = @transform_9, window_bounds = array<i64: 2, 128>}]} {
    %c0 = arith.constant 0 : index
    %c0_0 = arith.constant 0 : index
    %0 = vector.load %arg1[%c0, %c0_0] : memref<32x128xf32, #tpu.memory_space<vmem>>, vector<32x128xf32>
    %c0_1 = arith.constant 0 : index
    %c0_2 = arith.constant 0 : index
    %1 = vector.load %arg2[%c0_1, %c0_2] : memref<16x32xf32, #tpu.memory_space<vmem>>, vector<16x32xf32>
    %cst = arith.constant dense<0.000000e+00> : vector<16x128xf32>
    %2 = tpu.matmul %1, %0, %cst {dimension_numbers = #tpu.dot_dimension_numbers<[1], [0], [0], [1], [0, 0, 1, 1], [], []>} : vector<16x32xf32>, vector<32x128xf32>, vector<16x128xf32> -> vector<16x128xf32>
    %c0_3 = arith.constant 0 : index
    %c0_4 = arith.constant 0 : index
    %3 = vector.load %arg3[%c0_3, %c0_4] : memref<16x1xf32, #tpu.memory_space<vmem>>, vector<16x1xf32>
    %4 = vector.broadcast %3 : vector<16x1xf32> to vector<16x128xf32>
    %5 = arith.addf %2, %4 : vector<16x128xf32>
    %cst_5 = arith.constant 0.000000e+00 : f32
    %6 = vector.broadcast %cst_5 : f32 to vector<16x128xf32>
    %7 = arith.maximumf %5, %6 : vector<16x128xf32>
    %c0_6 = arith.constant 0 : index
    %c0_7 = arith.constant 0 : index
    %8 = vector.load %arg4[%c0_6, %c0_7] : memref<8x16xf32, #tpu.memory_space<vmem>>, vector<8x16xf32>
    %cst_8 = arith.constant dense<0.000000e+00> : vector<8x128xf32>
    %9 = tpu.matmul %8, %7, %cst_8 {dimension_numbers = #tpu.dot_dimension_numbers<[1], [0], [0], [1], [0, 0, 1, 1], [], []>} : vector<8x16xf32>, vector<16x128xf32>, vector<8x128xf32> -> vector<8x128xf32>
    %c0_9 = arith.constant 0 : index
    %c0_10 = arith.constant 0 : index
    %10 = vector.load %arg5[%c0_9, %c0_10] : memref<8x1xf32, #tpu.memory_space<vmem>>, vector<8x1xf32>
    %11 = vector.broadcast %10 : vector<8x1xf32> to vector<8x128xf32>
    %12 = arith.addf %9, %11 : vector<8x128xf32>
    %13 = arith.negf %12 : vector<8x128xf32>
    %14 = math.exp %13 : vector<8x128xf32>
    %cst_11 = arith.constant 1.000000e+00 : f32
    %15 = vector.broadcast %cst_11 : f32 to vector<8x128xf32>
    %16 = arith.addf %15, %14 : vector<8x128xf32>
    %17 = arith.divf %15, %16 : vector<8x128xf32>
    %c0_12 = arith.constant 0 : index
    %c0_13 = arith.constant 0 : index
    %18 = vector.load %arg6[%c0_12, %c0_13] : memref<4x8xf32, #tpu.memory_space<vmem>>, vector<4x8xf32>
    %cst_14 = arith.constant dense<0.000000e+00> : vector<4x128xf32>
    %19 = tpu.matmul %18, %17, %cst_14 {dimension_numbers = #tpu.dot_dimension_numbers<[1], [0], [0], [1], [0, 0, 1, 1], [], []>} : vector<4x8xf32>, vector<8x128xf32>, vector<4x128xf32> -> vector<4x128xf32>
    %c0_15 = arith.constant 0 : index
    %c0_16 = arith.constant 0 : index
    %20 = vector.load %arg7[%c0_15, %c0_16] : memref<4x1xf32, #tpu.memory_space<vmem>>, vector<4x1xf32>
    %21 = vector.broadcast %20 : vector<4x1xf32> to vector<4x128xf32>
    %22 = arith.addf %19, %21 : vector<4x128xf32>
    %23 = math.tanh %22 : vector<4x128xf32>
    %c0_17 = arith.constant 0 : index
    %c0_18 = arith.constant 0 : index
    %24 = vector.load %arg8[%c0_17, %c0_18] : memref<2x4xf32, #tpu.memory_space<vmem>>, vector<2x4xf32>
    %cst_19 = arith.constant dense<0.000000e+00> : vector<2x128xf32>
    %25 = tpu.matmul %24, %23, %cst_19 {dimension_numbers = #tpu.dot_dimension_numbers<[1], [0], [0], [1], [0, 0, 1, 1], [], []>} : vector<2x4xf32>, vector<4x128xf32>, vector<2x128xf32> -> vector<2x128xf32>
    %c0_20 = arith.constant 0 : index
    %c0_21 = arith.constant 0 : index
    %26 = vector.load %arg9[%c0_20, %c0_21] : memref<2x1xf32, #tpu.memory_space<vmem>>, vector<2x1xf32>
    %27 = vector.broadcast %26 : vector<2x1xf32> to vector<2x128xf32>
    %28 = arith.addf %25, %27 : vector<2x128xf32>
    %c0_22 = arith.constant 0 : index
    %c0_23 = arith.constant 0 : index
    %29 = vector.load %arg10[%c0_22, %c0_23] : memref<2x128xf32, #tpu.memory_space<vmem>>, vector<2x128xf32>
    tpu.vector_store %arg10[%c0_22, %c0_23], %28 {strides = array<i32>} : memref<2x128xf32, #tpu.memory_space<vmem>>, vector<2x128xf32>,
    return
  }
  func.func @transform_0(%arg0: i32) -> (i32, i32) {
    %c0_i32 = arith.constant 0 : i32
    %c0_i32_0 = arith.constant 0 : i32
    return %c0_i32, %arg0 : i32, i32
  }
  func.func @transform_1(%arg0: i32) -> (i32, i32) {
    %c0_i32 = arith.constant 0 : i32
    %c0_i32_0 = arith.constant 0 : i32
    %c0_i32_1 = arith.constant 0 : i32
    return %c0_i32, %c0_i32_0 : i32, i32
  }
  func.func @transform_2(%arg0: i32) -> (i32, i32) {
    %c0_i32 = arith.constant 0 : i32
    %c0_i32_0 = arith.constant 0 : i32
    %c0_i32_1 = arith.constant 0 : i32
    return %c0_i32, %c0_i32_0 : i32, i32
  }
  func.func @transform_3(%arg0: i32) -> (i32, i32) {
    %c0_i32 = arith.constant 0 : i32
    %c0_i32_0 = arith.constant 0 : i32
    %c0_i32_1 = arith.constant 0 : i32
    return %c0_i32, %c0_i32_0 : i32, i32
  }
  func.func @transform_4(%arg0: i32) -> (i32, i32) {
    %c0_i32 = arith.constant 0 : i32
    %c0_i32_0 = arith.constant 0 : i32
    %c0_i32_1 = arith.constant 0 : i32
    return %c0_i32, %c0_i32_0 : i32, i32
  }
  func.func @transform_5(%arg0: i32) -> (i32, i32) {
    %c0_i32 = arith.constant 0 : i32
    %c0_i32_0 = arith.constant 0 : i32
    %c0_i32_1 = arith.constant 0 : i32
    return %c0_i32, %c0_i32_0 : i32, i32
  }
  func.func @transform_6(%arg0: i32) -> (i32, i32) {
    %c0_i32 = arith.constant 0 : i32
    %c0_i32_0 = arith.constant 0 : i32
    %c0_i32_1 = arith.constant 0 : i32
    return %c0_i32, %c0_i32_0 : i32, i32
  }
  func.func @transform_7(%arg0: i32) -> (i32, i32) {
    %c0_i32 = arith.constant 0 : i32
    %c0_i32_0 = arith.constant 0 : i32
    %c0_i32_1 = arith.constant 0 : i32
    return %c0_i32, %c0_i32_0 : i32, i32
  }
  func.func @transform_8(%arg0: i32) -> (i32, i32) {
    %c0_i32 = arith.constant 0 : i32
    %c0_i32_0 = arith.constant 0 : i32
    %c0_i32_1 = arith.constant 0 : i32
    return %c0_i32, %c0_i32_0 : i32, i32
  }
  func.func @transform_9(%arg0: i32) -> (i32, i32) {
    %c0_i32 = arith.constant 0 : i32
    %c0_i32_0 = arith.constant 0 : i32
    return %c0_i32, %arg0 : i32, i32
  }
}

</mosaic_0001>

<llo_original>
// kernel: multi_layer_net.1
$region0: #{multi_layer_net.1}
  #allocation0 [shape = 'u32[]', space=smem, size = 0x4, offset = 0x4, fixed_abs, tag = 'smem constant byte address 0x4 - core index']
  #allocation1 [shape = 'u32[144,128]{1,0:T(1,128)}', space=vmem, size = 0x12000, scoped, tag = 'internal scratch']
  %s0 = inlined_call_operand.vmem [shape: f32[32,128], index: 0, kind: input, shape index: {}]
  %s1 = inlined_call_operand.vmem [shape: f32[16,32], index: 1, kind: input, shape index: {}]
  %s2 = inlined_call_operand.vmem [shape: f32[16,1], index: 2, kind: input, shape index: {}]
  %s3 = inlined_call_operand.vmem [shape: f32[8,16], index: 3, kind: input, shape index: {}]
  %s4 = inlined_call_operand.vmem [shape: f32[8,1], index: 4, kind: input, shape index: {}]
  %s5 = inlined_call_operand.vmem [shape: f32[4,8], index: 5, kind: input, shape index: {}]
  %s6 = inlined_call_operand.vmem [shape: f32[4,1], index: 6, kind: input, shape index: {}]
  %s7 = inlined_call_operand.vmem [shape: f32[2,4], index: 7, kind: input, shape index: {}]
  %s8 = inlined_call_operand.vmem [shape: f32[2,1], index: 8, kind: input, shape index: {}]
  %s9 = inlined_call_operand.vmem [shape: f32[2,128], index: 9, kind: output, shape index: {}]
  %s10 = sld [smem:[#allocation0]]
  $region46: #{multi_layer_net.1} parent=0
    _
  %s12 = ssub.s32 1, %s10
  %s13 = scalar_select 0, %s12, %s10
  // Predicated region
  $region2: #{multi_layer_net.1} parent=0 // pred_check
    _
  $region3: #{multi_layer_net.1} parent=0 // pred_check_branch
    %15 = sbr.rel (0) target = $region5
  $region4: #{multi_layer_net.1} parent=0 // pred_region
    _
  $region5: #{multi_layer_net.1} parent=0 // pred_fallthru
    _
  // Predicated region
  $region6: #{multi_layer_net.1} parent=0 // pred_check
    _
  $region7: #{multi_layer_net.1} parent=0 // pred_check_branch
    %17 = sbr.rel (0) target = $region9
  $region8: #{multi_layer_net.1} parent=0 // pred_region
    _
  $region9: #{multi_layer_net.1} parent=0 // pred_fallthru
    _
  // Predicated region
  $region10: #{multi_layer_net.1} parent=0 // pred_check
    _
  $region11: #{multi_layer_net.1} parent=0 // pred_check_branch
    %19 = sbr.rel (0) target = $region13
  $region12: #{multi_layer_net.1} parent=0 // pred_region
    _
  $region13: #{multi_layer_net.1} parent=0 // pred_fallthru
    _
  // Predicated region
  $region14: #{multi_layer_net.1} parent=0 // pred_check
    _
  $region15: #{multi_layer_net.1} parent=0 // pred_check_branch
    %21 = sbr.rel (0) target = $region17
  $region16: #{multi_layer_net.1} parent=0 // pred_region
    _
  $region17: #{multi_layer_net.1} parent=0 // pred_fallthru
    _
  // Predicated region
  $region18: #{multi_layer_net.1} parent=0 // pred_check
    _
  $region19: #{multi_layer_net.1} parent=0 // pred_check_branch
    %23 = sbr.rel (0) target = $region21
  $region20: #{multi_layer_net.1} parent=0 // pred_region
    _
  $region21: #{multi_layer_net.1} parent=0 // pred_fallthru
    _
  // Predicated region
  $region22: #{multi_layer_net.1} parent=0 // pred_check
    _
  $region23: #{multi_layer_net.1} parent=0 // pred_check_branch
    %25 = sbr.rel (0) target = $region25
  $region24: #{multi_layer_net.1} parent=0 // pred_region
    _
  $region25: #{multi_layer_net.1} parent=0 // pred_fallthru
    _
  // Predicated region
  $region26: #{multi_layer_net.1} parent=0 // pred_check
    _
  $region27: #{multi_layer_net.1} parent=0 // pred_check_branch
    %27 = sbr.rel (0) target = $region29
  $region28: #{multi_layer_net.1} parent=0 // pred_region
    _
  $region29: #{multi_layer_net.1} parent=0 // pred_fallthru
    _
  // Predicated region
  $region30: #{multi_layer_net.1} parent=0 // pred_check
    _
  $region31: #{multi_layer_net.1} parent=0 // pred_check_branch
    %29 = sbr.rel (0) target = $region33
  $region32: #{multi_layer_net.1} parent=0 // pred_region
    _
  $region33: #{multi_layer_net.1} parent=0 // pred_fallthru
    _
  // Predicated region
  $region34: #{multi_layer_net.1} parent=0 // pred_check
    _
  $region35: #{multi_layer_net.1} parent=0 // pred_check_branch
    %31 = sbr.rel (0) target = $region37
  $region36: #{multi_layer_net.1} parent=0 // pred_region
    _
  $region37: #{multi_layer_net.1} parent=0 // pred_fallthru
    _
  %v32 = vld [vmem:[%s0] sm:$0xff]
  %v33 = vld [vmem:[%s0 + $0x8] sm:$0xff]
  %v34 = vld [vmem:[%s0 + $0x10] sm:$0xff]
  %v35 = vld [vmem:[%s0 + $0x18] sm:$0xff]
  %v36 = vld [vmem:[%s1] sm:$0xff]
  %v37 = vld [vmem:[%s1 + $0x8] sm:$0xff]
  %v38 = vld [vmem:[%s2] sm:$0xff]
  %v39 = vld [vmem:[%s2 + $0x8] sm:$0xff]
  %41 = vset.pattern.permute.xlu0 0
  %42 = vperm.xlu0 %41, %v38
  %v43 = vpop.permute.xlu0 %42
  %46 = vset.pattern.permute.xlu0 0
  %47 = vperm.xlu0 %46, %v39
  %v48 = vpop.permute.xlu0 %47
  %vm50 = vcmask 261120
  %v52 = vsel %vm50, %v36, 0
  %v55 = vsel %vm50, %v37, 0
  %57 = vmatprep.subr.mxu0 0.0
  %58 = vmatpush1.msra.mxu0 %v32
  %59 = vmatprep.subr.mxu0 0.0
  %60 = vmatpush1.msra.mxu0 %v33
  %61 = vmatprep.subr.mxu0 0.0
  %62 = vmatpush1.msra.mxu0 %v34
  %63 = vmatprep.subr.mxu0 0.0
  %64 = vmatpush1.msra.mxu0 %v35
  %65 = vmatprep.subr.mxu0 0.0
  %66 = vmatpush1.msra.mxu0 0.0
  %67 = vmatprep.subr.mxu0 0.0
  %68 = vmatpush1.msra.mxu0 0.0
  %69 = vmatprep.subr.mxu0 0.0
  %70 = vmatpush1.msra.mxu0 0.0
  %71 = vmatprep.subr.mxu0 0.0
  %72 = vmatpush1.msra.mxu0 0.0
  %73 = vmatprep.subr.mxu0 0.0
  %74 = vmatpush1.msra.mxu0 0.0
  %75 = vmatprep.subr.mxu0 0.0
  %76 = vmatpush1.msra.mxu0 0.0
  %77 = vmatprep.subr.mxu0 0.0
  %78 = vmatpush1.msra.mxu0 0.0
  %79 = vmatprep.subr.mxu0 0.0
  %80 = vmatpush1.msra.mxu0 0.0
  %81 = vmatprep.subr.mxu0 0.0
  %82 = vmatpush1.msra.mxu0 0.0
  %83 = vmatprep.subr.mxu0 0.0
  %84 = vmatpush1.msra.mxu0 0.0
  %85 = vmatprep.subr.mxu0 0.0
  %86 = vmatpush1.msra.mxu0 0.0
  %87 = vmatprep.subr.mxu0 0.0
  %88 = vmatpush1.msra.mxu0 0.0
  %89 = vmatprep.subr.mxu0 0.0
  %90 = vmatpush1.msra.mxu0 0.0
  %91 = vmatprep.subr.mxu0 0.0
  %92 = vmatpush1.msra.mxu0 0.0
  %93 = vmatprep.subr.mxu0 0.0
  %94 = vmatpush1.msra.mxu0 0.0
  %95 = vmatprep.subr.mxu0 0.0
  %96 = vmatpush1.msra.mxu0 0.0
  %97 = vmatprep.subr.mxu0 0.0
  %98 = vmatpush1.msra.mxu0 0.0
  %99 = vmatprep.subr.mxu0 0.0
  %100 = vmatpush1.msra.mxu0 0.0
  %101 = vmatprep.subr.mxu0 0.0
  %102 = vmatpush1.msra.mxu0 0.0
  %103 = vmatprep.subr.mxu0 0.0
  %104 = vmatpush1.msra.mxu0 0.0
  %105 = vmatprep.subr.mxu0 0.0
  %106 = vmatpush1.msra.mxu0 0.0
  %107 = vmatprep.subr.mxu0 0.0
  %108 = vmatpush1.msra.mxu0 0.0
  %109 = vmatprep.subr.mxu0 0.0
  %110 = vmatpush1.msra.mxu0 0.0
  %111 = vmatprep.subr.mxu0 0.0
  %112 = vmatpush1.msra.mxu0 0.0
  %113 = vmatprep.subr.mxu0 0.0
  %114 = vmatpush1.msra.mxu0 0.0
  %115 = vmatprep.subr.mxu0 0.0
  %116 = vmatpush1.msra.mxu0 0.0
  %117 = vmatprep.subr.mxu0 0.0
  %118 = vmatpush1.msra.mxu0 0.0
  %119 = vmatprep.subr.mxu0 0.0
  %120 = vmatpush1.msra.mxu0 0.0
  %121 = vmatprep.mubr.f32.mxu0 0.0
  %122 = vmatmul.mubr.f32.gmra.mrb[0].mxu0 %v52
  %v123 = vpop.f32.mrb[0].mxu0
  %v124 = vadd.f32 %v43, %v123
  %v125 = vpop.f32.mrb[0].mxu0
  %126 = vmatprep.mubr.f32.mxu0 0.0
  %127 = vmatmul.mubr.f32.gmra.mrb[0].mxu0 %v55
  %v128 = vpop.f32.mrb[0].mxu0
  %v129 = vadd.f32 %v48, %v128
  %v130 = vpop.f32.mrb[0].mxu0
  %131 = vdwg.mxu0
  %v132 = vmax.f32 %v124, 0.0
  %v133 = vmax.f32 %v129, 0.0
  %v134 = vld [vmem:[%s3] sm:$0xff]
  %v135 = vld [vmem:[%s4] sm:$0xff]
  %137 = vset.pattern.permute.xlu0 0
  %138 = vperm.xlu0 %137, %v135
  %v139 = vpop.permute.xlu0 %138
  %vm141 = vcmask 130048
  %v143 = vsel %vm141, %v134, 0
  %145 = vmatprep.subr.mxu0 0.0
  %146 = vmatpush1.msra.mxu0 %v132
  %147 = vmatprep.subr.mxu0 0.0
  %148 = vmatpush1.msra.mxu0 %v133
  %149 = vmatprep.subr.mxu0 0.0
  %150 = vmatpush1.msra.mxu0 0.0
  %151 = vmatprep.subr.mxu0 0.0
  %152 = vmatpush1.msra.mxu0 0.0
  %153 = vmatprep.subr.mxu0 0.0
  %154 = vmatpush1.msra.mxu0 0.0
  %155 = vmatprep.subr.mxu0 0.0
  %156 = vmatpush1.msra.mxu0 0.0
  %157 = vmatprep.subr.mxu0 0.0
  %158 = vmatpush1.msra.mxu0 0.0
  %159 = vmatprep.subr.mxu0 0.0
  %160 = vmatpush1.msra.mxu0 0.0
  %161 = vmatprep.subr.mxu0 0.0
  %162 = vmatpush1.msra.mxu0 0.0
  %163 = vmatprep.subr.mxu0 0.0
  %164 = vmatpush1.msra.mxu0 0.0
  %165 = vmatprep.subr.mxu0 0.0
  %166 = vmatpush1.msra.mxu0 0.0
  %167 = vmatprep.subr.mxu0 0.0
  %168 = vmatpush1.msra.mxu0 0.0
  %169 = vmatprep.subr.mxu0 0.0
  %170 = vmatpush1.msra.mxu0 0.0
  %171 = vmatprep.subr.mxu0 0.0
  %172 = vmatpush1.msra.mxu0 0.0
  %173 = vmatprep.subr.mxu0 0.0
  %174 = vmatpush1.msra.mxu0 0.0
  %175 = vmatprep.subr.mxu0 0.0
  %176 = vmatpush1.msra.mxu0 0.0
  %177 = vmatprep.subr.mxu0 0.0
  %178 = vmatpush1.msra.mxu0 0.0
  %179 = vmatprep.subr.mxu0 0.0
  %180 = vmatpush1.msra.mxu0 0.0
  %181 = vmatprep.subr.mxu0 0.0
  %182 = vmatpush1.msra.mxu0 0.0
  %183 = vmatprep.subr.mxu0 0.0
  %184 = vmatpush1.msra.mxu0 0.0
  %185 = vmatprep.subr.mxu0 0.0
  %186 = vmatpush1.msra.mxu0 0.0
  %187 = vmatprep.subr.mxu0 0.0
  %188 = vmatpush1.msra.mxu0 0.0
  %189 = vmatprep.subr.mxu0 0.0
  %190 = vmatpush1.msra.mxu0 0.0
  %191 = vmatprep.subr.mxu0 0.0
  %192 = vmatpush1.msra.mxu0 0.0
  %193 = vmatprep.subr.mxu0 0.0
  %194 = vmatpush1.msra.mxu0 0.0
  %195 = vmatprep.subr.mxu0 0.0
  %196 = vmatpush1.msra.mxu0 0.0
  %197 = vmatprep.subr.mxu0 0.0
  %198 = vmatpush1.msra.mxu0 0.0
  %199 = vmatprep.subr.mxu0 0.0
  %200 = vmatpush1.msra.mxu0 0.0
  %201 = vmatprep.subr.mxu0 0.0
  %202 = vmatpush1.msra.mxu0 0.0
  %203 = vmatprep.subr.mxu0 0.0
  %204 = vmatpush1.msra.mxu0 0.0
  %205 = vmatprep.subr.mxu0 0.0
  %206 = vmatpush1.msra.mxu0 0.0
  %207 = vmatprep.subr.mxu0 0.0
  %208 = vmatpush1.msra.mxu0 0.0
  %209 = vmatprep.mubr.f32.mxu0 0.0
  %210 = vmatmul.mubr.f32.gmra.mrb[0].mxu0 %v143
  %v211 = vpop.f32.mrb[0].mxu0
  %v212 = vadd.f32 %v139, %v211
  %v213 = vpop.f32.mrb[0].mxu0
  %214 = vdwg.mxu0
  %v215 = vxor.u32 %v212, 2147483648
  %v216 = vmul.f32 %v215, 1.442695
  %v217 = vpow.pop %v216
  %v218 = vadd.f32 %v217, 1.0
  %v219 = vrcp.pop %v218
  %v220 = vmul.f32 1.0, %v219
  %v221 = vld [vmem:[%s5] sm:$0xf]
  %v222 = vld [vmem:[%s6] sm:$0xf]
  %224 = vset.pattern.permute.xlu0 0
  %225 = vperm.xlu0 %224, %v222
  %v226 = vpop.permute.xlu0 %225
  %vm228 = vcmask 64512
  %v230 = vsel %vm228, %v221, 0
  %232 = vmatprep.subr.mxu0 0.0
  %233 = vmatpush1.msra.mxu0 %v220
  %234 = vmatprep.subr.mxu0 0.0
  %235 = vmatpush1.msra.mxu0 0.0
  %236 = vmatprep.subr.mxu0 0.0
  %237 = vmatpush1.msra.mxu0 0.0
  %238 = vmatprep.subr.mxu0 0.0
  %239 = vmatpush1.msra.mxu0 0.0
  %240 = vmatprep.subr.mxu0 0.0
  %241 = vmatpush1.msra.mxu0 0.0
  %242 = vmatprep.subr.mxu0 0.0
  %243 = vmatpush1.msra.mxu0 0.0
  %244 = vmatprep.subr.mxu0 0.0
  %245 = vmatpush1.msra.mxu0 0.0
  %246 = vmatprep.subr.mxu0 0.0
  %247 = vmatpush1.msra.mxu0 0.0
  %248 = vmatprep.subr.mxu0 0.0
  %249 = vmatpush1.msra.mxu0 0.0
  %250 = vmatprep.subr.mxu0 0.0
  %251 = vmatpush1.msra.mxu0 0.0
  %252 = vmatprep.subr.mxu0 0.0
  %253 = vmatpush1.msra.mxu0 0.0
  %254 = vmatprep.subr.mxu0 0.0
  %255 = vmatpush1.msra.mxu0 0.0
  %256 = vmatprep.subr.mxu0 0.0
  %257 = vmatpush1.msra.mxu0 0.0
  %258 = vmatprep.subr.mxu0 0.0
  %259 = vmatpush1.msra.mxu0 0.0
  %260 = vmatprep.subr.mxu0 0.0
  %261 = vmatpush1.msra.mxu0 0.0
  %262 = vmatprep.subr.mxu0 0.0
  %263 = vmatpush1.msra.mxu0 0.0
  %264 = vmatprep.subr.mxu0 0.0
  %265 = vmatpush1.msra.mxu0 0.0
  %266 = vmatprep.subr.mxu0 0.0
  %267 = vmatpush1.msra.mxu0 0.0
  %268 = vmatprep.subr.mxu0 0.0
  %269 = vmatpush1.msra.mxu0 0.0
  %270 = vmatprep.subr.mxu0 0.0
  %271 = vmatpush1.msra.mxu0 0.0
  %272 = vmatprep.subr.mxu0 0.0
  %273 = vmatpush1.msra.mxu0 0.0
  %274 = vmatprep.subr.mxu0 0.0
  %275 = vmatpush1.msra.mxu0 0.0
  %276 = vmatprep.subr.mxu0 0.0
  %277 = vmatpush1.msra.mxu0 0.0
  %278 = vmatprep.subr.mxu0 0.0
  %279 = vmatpush1.msra.mxu0 0.0
  %280 = vmatprep.subr.mxu0 0.0
  %281 = vmatpush1.msra.mxu0 0.0
  %282 = vmatprep.subr.mxu0 0.0
  %283 = vmatpush1.msra.mxu0 0.0
  %284 = vmatprep.subr.mxu0 0.0
  %285 = vmatpush1.msra.mxu0 0.0
  %286 = vmatprep.subr.mxu0 0.0
  %287 = vmatpush1.msra.mxu0 0.0
  %288 = vmatprep.subr.mxu0 0.0
  %289 = vmatpush1.msra.mxu0 0.0
  %290 = vmatprep.subr.mxu0 0.0
  %291 = vmatpush1.msra.mxu0 0.0
  %292 = vmatprep.subr.mxu0 0.0
  %293 = vmatpush1.msra.mxu0 0.0
  %294 = vmatprep.subr.mxu0 0.0
  %295 = vmatpush1.msra.mxu0 0.0
  %296 = vmatprep.mubr.f32.mxu0 0.0
  %297 = vmatmul.mubr.f32.gmra.mrb[0].mxu0 %v230
  %v298 = vpop.f32.mrb[0].mxu0
  %v299 = vadd.f32 %v226, %v298
  %v300 = vpop.f32.mrb[0].mxu0
  %301 = vdwg.mxu0
  %v302 = vtanh.pop %v299
  %v303 = vld [vmem:[%s7] sm:$0x3]
  %v304 = vld [vmem:[%s8] sm:$0x3]
  %306 = vset.pattern.permute.xlu0 0
  %307 = vperm.xlu0 %306, %v304
  %v308 = vpop.permute.xlu0 %307
  %vm310 = vcmask 31744
  %v312 = vsel %vm310, %v303, 0
  %vm314 = vcmask 1043456
  %v316 = vsel %vm314, %v302, 0
  %318 = vmatprep.subr.mxu0 0.0
  %319 = vmatpush1.msra.mxu0 %v316
  %320 = vmatprep.subr.mxu0 0.0
  %321 = vmatpush1.msra.mxu0 0.0
  %322 = vmatprep.subr.mxu0 0.0
  %323 = vmatpush1.msra.mxu0 0.0
  %324 = vmatprep.subr.mxu0 0.0
  %325 = vmatpush1.msra.mxu0 0.0
  %326 = vmatprep.subr.mxu0 0.0
  %327 = vmatpush1.msra.mxu0 0.0
  %328 = vmatprep.subr.mxu0 0.0
  %329 = vmatpush1.msra.mxu0 0.0
  %330 = vmatprep.subr.mxu0 0.0
  %331 = vmatpush1.msra.mxu0 0.0
  %332 = vmatprep.subr.mxu0 0.0
  %333 = vmatpush1.msra.mxu0 0.0
  %334 = vmatprep.subr.mxu0 0.0
  %335 = vmatpush1.msra.mxu0 0.0
  %336 = vmatprep.subr.mxu0 0.0
  %337 = vmatpush1.msra.mxu0 0.0
  %338 = vmatprep.subr.mxu0 0.0
  %339 = vmatpush1.msra.mxu0 0.0
  %340 = vmatprep.subr.mxu0 0.0
  %341 = vmatpush1.msra.mxu0 0.0
  %342 = vmatprep.subr.mxu0 0.0
  %343 = vmatpush1.msra.mxu0 0.0
  %344 = vmatprep.subr.mxu0 0.0
  %345 = vmatpush1.msra.mxu0 0.0
  %346 = vmatprep.subr.mxu0 0.0
  %347 = vmatpush1.msra.mxu0 0.0
  %348 = vmatprep.subr.mxu0 0.0
  %349 = vmatpush1.msra.mxu0 0.0
  %350 = vmatprep.subr.mxu0 0.0
  %351 = vmatpush1.msra.mxu0 0.0
  %352 = vmatprep.subr.mxu0 0.0
  %353 = vmatpush1.msra.mxu0 0.0
  %354 = vmatprep.subr.mxu0 0.0
  %355 = vmatpush1.msra.mxu0 0.0
  %356 = vmatprep.subr.mxu0 0.0
  %357 = vmatpush1.msra.mxu0 0.0
  %358 = vmatprep.subr.mxu0 0.0
  %359 = vmatpush1.msra.mxu0 0.0
  %360 = vmatprep.subr.mxu0 0.0
  %361 = vmatpush1.msra.mxu0 0.0
  %362 = vmatprep.subr.mxu0 0.0
  %363 = vmatpush1.msra.mxu0 0.0
  %364 = vmatprep.subr.mxu0 0.0
  %365 = vmatpush1.msra.mxu0 0.0
  %366 = vmatprep.subr.mxu0 0.0
  %367 = vmatpush1.msra.mxu0 0.0
  %368 = vmatprep.subr.mxu0 0.0
  %369 = vmatpush1.msra.mxu0 0.0
  %370 = vmatprep.subr.mxu0 0.0
  %371 = vmatpush1.msra.mxu0 0.0
  %372 = vmatprep.subr.mxu0 0.0
  %373 = vmatpush1.msra.mxu0 0.0
  %374 = vmatprep.subr.mxu0 0.0
  %375 = vmatpush1.msra.mxu0 0.0
  %376 = vmatprep.subr.mxu0 0.0
  %377 = vmatpush1.msra.mxu0 0.0
  %378 = vmatprep.subr.mxu0 0.0
  %379 = vmatpush1.msra.mxu0 0.0
  %380 = vmatprep.subr.mxu0 0.0
  %381 = vmatpush1.msra.mxu0 0.0
  %382 = vmatprep.mubr.f32.mxu0 0.0
  %383 = vmatmul.mubr.f32.gmra.mrb[0].mxu0 %v312
  %v384 = vpop.f32.mrb[0].mxu0
  %v385 = vadd.f32 %v308, %v384
  %v386 = vpop.f32.mrb[0].mxu0
  %387 = vdwg.mxu0
  %388 = vst [vmem:[%s9] sm:$0x3] %v385
  // Predicated region
  $region38: #{multi_layer_net.1} parent=0 // pred_check
    _
  $region39: #{multi_layer_net.1} parent=0 // pred_check_branch
    %390 = sbr.rel (0) target = $region41
  $region40: #{multi_layer_net.1} parent=0 // pred_region
    _
  $region41: #{multi_layer_net.1} parent=0 // pred_fallthru
    _
  // Predicated region
  $region42: #{multi_layer_net.1} parent=0 // pred_check
    _
  $region43: #{multi_layer_net.1} parent=0 // pred_check_branch
    %392 = sbr.rel (0) target = $region45
  $region44: #{multi_layer_net.1} parent=0 // pred_region
    _
  $region45: #{multi_layer_net.1} parent=0 // pred_fallthru
    _

</llo_original>
